<compile_context>
chip_gen: v7x
topology: tpu7x:2x2x1
jax: 0.10.0
libtpu: 0.0.40
codegen_flags: <defaults>
</compile_context>

<pallas_src>
import functools

import jax
import jax.numpy as jnp
from jax.experimental import pallas as pl
from jax.experimental.pallas import tpu as pltpu

_H = 128  # lane-padded hidden / output width


def _round_up(n, m):
    return ((n + m - 1) // m) * m


def _pad_to(a, shape):
    pads = [(0, s - d) for d, s in zip(a.shape, shape)]
    return jnp.pad(a, pads)


def _mlp_kernel(x_ref, w1_ref, b1_ref, w2_ref, b2_ref, w3_ref, b3_ref,
                w4_ref, b4_ref, o_ref):
    """Fused 4-layer MLP (Linear+ReLU x3, Linear) on one batch tile.

    All hidden/output widths are padded to 128 lanes; padded weight/bias
    entries are zero so the extra lanes stay exactly zero through ReLU and
    contribute nothing downstream.
    """
    cdt = w1_ref.dtype   # MXU input dtype (f32 or bf16); accumulation is f32.
    x = x_ref[...]

    h = jnp.dot(x, w1_ref[...], preferred_element_type=jnp.float32) + b1_ref[...]
    h = jnp.maximum(h, 0.0)

    h = jnp.dot(h.astype(cdt), w2_ref[...],
                preferred_element_type=jnp.float32) + b2_ref[...]
    h = jnp.maximum(h, 0.0)

    h = jnp.dot(h.astype(cdt), w3_ref[...],
                preferred_element_type=jnp.float32) + b3_ref[...]
    h = jnp.maximum(h, 0.0)

    h = jnp.dot(h.astype(cdt), w4_ref[...],
                preferred_element_type=jnp.float32) + b4_ref[...]

    o_ref[...] = h.astype(o_ref.dtype)   # (bb, 128) lane-dense store


@functools.partial(jax.jit, static_argnames=("block_b", "compute_dtype"))
def std_regressor_forward(x, params, *, block_b=512, compute_dtype=jnp.float32):
    """StdRegressor forward pass as a single fused Pallas kernel.

    x: (B, input_dim) float32
    params: dict with w1..w4 stored (in, out) and b1..b4 stored (1, out)
    compute_dtype: dtype fed to the MXU (use jnp.bfloat16 on v6e/v7x for
                   2x+ MXU throughput; accumulation / bias / ReLU stay f32).
    returns: (B, 1) float32
    """
    B, D = x.shape

    # Effective batch tile: whole (padded) batch for small B, else block_b.
    bb = min(_round_up(block_b, 8), _round_up(B, 8))
    Bp = _round_up(B, bb)
    xp = x if Bp == B else jnp.pad(x, ((0, Bp - B), (0, 0)))
    xp = xp.astype(compute_dtype)

    # Zero-pad every layer to 128 lanes (weights are ~0.3 MB total, free).
    w1 = _pad_to(params["w1"], (D, _H)).astype(compute_dtype)
    b1 = _pad_to(params["b1"], (1, _H))
    w2 = _pad_to(params["w2"], (_H, _H)).astype(compute_dtype)
    b2 = _pad_to(params["b2"], (1, _H))
    w3 = _pad_to(params["w3"], (_H, _H)).astype(compute_dtype)
    b3 = _pad_to(params["b3"], (1, _H))
    w4 = _pad_to(params["w4"], (_H, _H)).astype(compute_dtype)
    b4 = _pad_to(params["b4"], (1, _H))

    grid = (Bp // bb,)

    # Constant-index blocks: fetched once, resident across all grid steps.
    def const2d(shape):
        return pl.BlockSpec(shape, lambda i: (0, 0))

    out = pl.pallas_call(
        _mlp_kernel,
        out_shape=jax.ShapeDtypeStruct((Bp, _H), jnp.float32),
        grid_spec=pltpu.PrefetchScalarGridSpec(
            num_scalar_prefetch=0,
            grid=grid,
            in_specs=[
                pl.BlockSpec((bb, D), lambda i: (i, 0)),   # x tile over batch
                const2d((D, _H)), const2d((1, _H)),
                const2d((_H, _H)), const2d((1, _H)),
                const2d((_H, _H)), const2d((1, _H)),
                const2d((_H, _H)), const2d((1, _H)),
            ],
            out_specs=pl.BlockSpec((bb, _H), lambda i: (i, 0)),
        ),
        compiler_params=pltpu.CompilerParams(
            dimension_semantics=("parallel",)),
    )(xp, w1, b1, w2, b2, w3, b3, w4, b4)

    # Column 0 holds the real fc4 output; padded columns are exactly zero.
    return out[:B, 0:1]


def init_params(key, input_dim):
    """Deterministic init mimicking nn.Linear's U(-1/sqrt(fan_in), 1/sqrt(fan_in)).

    Weights are stored transposed as (in_features, out_features).
    """
    dims = [(input_dim, 32), (32, 128), (128, 64), (64, 1)]
    params = {}
    keys = jax.random.split(key, 2 * len(dims))
    for idx, (fan_in, fan_out) in enumerate(dims):
        bound = 1.0 / jnp.sqrt(jnp.float32(fan_in))
        w = jax.random.uniform(keys[2 * idx], (fan_in, fan_out),
                               minval=-bound, maxval=bound, dtype=jnp.float32)
        b = jax.random.uniform(keys[2 * idx + 1], (1, fan_out),
                               minval=-bound, maxval=bound, dtype=jnp.float32)
        params[f"w{idx + 1}"] = w
        params[f"b{idx + 1}"] = b
    return params


def reference_forward(x, params):
    h = jnp.maximum(x @ params["w1"] + params["b1"], 0.0)
    h = jnp.maximum(h @ params["w2"] + params["b2"], 0.0)
    h = jnp.maximum(h @ params["w3"] + params["b3"], 0.0)
    return h @ params["w4"] + params["b4"]


if __name__ == "__main__":
    key = jax.random.PRNGKey(0)
    k_x, k_p = jax.random.split(key)

    input_dim = 16
    batch = 16

    x = jax.random.normal(k_x, (batch, input_dim), dtype=jnp.float32)
    params = init_params(k_p, input_dim)

    # f32 path (tight tolerance against pure-JAX reference).
    out = jax.block_until_ready(std_regressor_forward(x, params))
    ref = reference_forward(x, params)
    assert out.shape == (batch, 1)
    assert jnp.allclose(out, ref, atol=1e-5, rtol=1e-5)

    # Non-divisible batch exercises wrapper-side padding (no divisibility assert).
    x13 = x[:13]
    out13 = jax.block_until_ready(std_regressor_forward(x13, params))
    assert out13.shape == (13, 1)
    assert jnp.allclose(out13, ref[:13], atol=1e-5, rtol=1e-5)

    # bf16 MXU path (v6e/v7x fast path); f32 accumulate keeps it close.
    out_bf16 = jax.block_until_ready(
        std_regressor_forward(x, params, compute_dtype=jnp.bfloat16))
    assert out_bf16.shape == (batch, 1)
    assert jnp.allclose(out_bf16, ref, atol=1e-1, rtol=1e-1)

    print("KERNEL_OK")
</pallas_src>

<mosaic_0001>
module attributes {stable_mosaic.version = 11 : i64} {
  func.func @_mlp_kernel(%arg0: i32, %arg1: memref<16x16xf32, #tpu.memory_space<vmem>>, %arg2: memref<16x128xf32, #tpu.memory_space<vmem>>, %arg3: memref<1x128xf32, #tpu.memory_space<vmem>>, %arg4: memref<128x128xf32, #tpu.memory_space<vmem>>, %arg5: memref<1x128xf32, #tpu.memory_space<vmem>>, %arg6: memref<128x128xf32, #tpu.memory_space<vmem>>, %arg7: memref<1x128xf32, #tpu.memory_space<vmem>>, %arg8: memref<128x128xf32, #tpu.memory_space<vmem>>, %arg9: memref<1x128xf32, #tpu.memory_space<vmem>>, %arg10: memref<16x128xf32, #tpu.memory_space<vmem>>) attributes {dimension_semantics = [#tpu.dimension_semantics<parallel>], iteration_bounds = array<i64: 1>, scalar_prefetch = 0 : i64, scratch_operands = 0 : i64, tpu.core_type = #tpu.core_type<tc>, window_params = [{transform_indices = @transform_0, window_bounds = array<i64: 16, 16>}, {pipeline_mode = #tpu.pipeline_mode<synchronous>, transform_indices = @transform_1, window_bounds = array<i64: 16, 128>}, {pipeline_mode = #tpu.pipeline_mode<synchronous>, transform_indices = @transform_2, window_bounds = array<i64: 1, 128>}, {pipeline_mode = #tpu.pipeline_mode<synchronous>, transform_indices = @transform_3, window_bounds = array<i64: 128, 128>}, {pipeline_mode = #tpu.pipeline_mode<synchronous>, transform_indices = @transform_4, window_bounds = array<i64: 1, 128>}, {pipeline_mode = #tpu.pipeline_mode<synchronous>, transform_indices = @transform_5, window_bounds = array<i64: 128, 128>}, {pipeline_mode = #tpu.pipeline_mode<synchronous>, transform_indices = @transform_6, window_bounds = array<i64: 1, 128>}, {pipeline_mode = #tpu.pipeline_mode<synchronous>, transform_indices = @transform_7, window_bounds = array<i64: 128, 128>}, {pipeline_mode = #tpu.pipeline_mode<synchronous>, transform_indices = @transform_8, window_bounds = array<i64: 1, 128>}, {transform_indices = @transform_9, window_bounds = array<i64: 16, 128>}]} {
    %c0 = arith.constant 0 : index
    %c0_0 = arith.constant 0 : index
    %0 = vector.load %arg1[%c0, %c0_0] : memref<16x16xf32, #tpu.memory_space<vmem>>, vector<16x16xf32>
    %c0_1 = arith.constant 0 : index
    %c0_2 = arith.constant 0 : index
    %1 = vector.load %arg2[%c0_1, %c0_2] : memref<16x128xf32, #tpu.memory_space<vmem>>, vector<16x128xf32>
    %cst = arith.constant dense<0.000000e+00> : vector<16x128xf32>
    %2 = tpu.matmul %0, %1, %cst {dimension_numbers = #tpu.dot_dimension_numbers<[1], [0], [0], [1], [0, 0, 1, 1], [], []>} : vector<16x16xf32>, vector<16x128xf32>, vector<16x128xf32> -> vector<16x128xf32>
    %c0_3 = arith.constant 0 : index
    %c0_4 = arith.constant 0 : index
    %3 = vector.load %arg3[%c0_3, %c0_4] : memref<1x128xf32, #tpu.memory_space<vmem>>, vector<1x128xf32>
    %4 = vector.broadcast %3 : vector<1x128xf32> to vector<16x128xf32>
    %5 = arith.addf %2, %4 : vector<16x128xf32>
    %cst_5 = arith.constant 0.000000e+00 : f32
    %6 = vector.broadcast %cst_5 : f32 to vector<16x128xf32>
    %7 = arith.maximumf %5, %6 : vector<16x128xf32>
    %c0_6 = arith.constant 0 : index
    %c0_7 = arith.constant 0 : index
    %8 = vector.load %arg4[%c0_6, %c0_7] : memref<128x128xf32, #tpu.memory_space<vmem>>, vector<128x128xf32>
    %cst_8 = arith.constant dense<0.000000e+00> : vector<16x128xf32>
    %9 = tpu.matmul %7, %8, %cst_8 {dimension_numbers = #tpu.dot_dimension_numbers<[1], [0], [0], [1], [0, 0, 1, 1], [], []>} : vector<16x128xf32>, vector<128x128xf32>, vector<16x128xf32> -> vector<16x128xf32>
    %c0_9 = arith.constant 0 : index
    %c0_10 = arith.constant 0 : index
    %10 = vector.load %arg5[%c0_9, %c0_10] : memref<1x128xf32, #tpu.memory_space<vmem>>, vector<1x128xf32>
    %11 = vector.broadcast %10 : vector<1x128xf32> to vector<16x128xf32>
    %12 = arith.addf %9, %11 : vector<16x128xf32>
    %cst_11 = arith.constant 0.000000e+00 : f32
    %13 = vector.broadcast %cst_11 : f32 to vector<16x128xf32>
    %14 = arith.maximumf %12, %13 : vector<16x128xf32>
    %c0_12 = arith.constant 0 : index
    %c0_13 = arith.constant 0 : index
    %15 = vector.load %arg6[%c0_12, %c0_13] : memref<128x128xf32, #tpu.memory_space<vmem>>, vector<128x128xf32>
    %cst_14 = arith.constant dense<0.000000e+00> : vector<16x128xf32>
    %16 = tpu.matmul %14, %15, %cst_14 {dimension_numbers = #tpu.dot_dimension_numbers<[1], [0], [0], [1], [0, 0, 1, 1], [], []>} : vector<16x128xf32>, vector<128x128xf32>, vector<16x128xf32> -> vector<16x128xf32>
    %c0_15 = arith.constant 0 : index
    %c0_16 = arith.constant 0 : index
    %17 = vector.load %arg7[%c0_15, %c0_16] : memref<1x128xf32, #tpu.memory_space<vmem>>, vector<1x128xf32>
    %18 = vector.broadcast %17 : vector<1x128xf32> to vector<16x128xf32>
    %19 = arith.addf %16, %18 : vector<16x128xf32>
    %cst_17 = arith.constant 0.000000e+00 : f32
    %20 = vector.broadcast %cst_17 : f32 to vector<16x128xf32>
    %21 = arith.maximumf %19, %20 : vector<16x128xf32>
    %c0_18 = arith.constant 0 : index
    %c0_19 = arith.constant 0 : index
    %22 = vector.load %arg8[%c0_18, %c0_19] : memref<128x128xf32, #tpu.memory_space<vmem>>, vector<128x128xf32>
    %cst_20 = arith.constant dense<0.000000e+00> : vector<16x128xf32>
    %23 = tpu.matmul %21, %22, %cst_20 {dimension_numbers = #tpu.dot_dimension_numbers<[1], [0], [0], [1], [0, 0, 1, 1], [], []>} : vector<16x128xf32>, vector<128x128xf32>, vector<16x128xf32> -> vector<16x128xf32>
    %c0_21 = arith.constant 0 : index
    %c0_22 = arith.constant 0 : index
    %24 = vector.load %arg9[%c0_21, %c0_22] : memref<1x128xf32, #tpu.memory_space<vmem>>, vector<1x128xf32>
    %25 = vector.broadcast %24 : vector<1x128xf32> to vector<16x128xf32>
    %26 = arith.addf %23, %25 : vector<16x128xf32>
    %c0_23 = arith.constant 0 : index
    %c0_24 = arith.constant 0 : index
    %27 = vector.load %arg10[%c0_23, %c0_24] : memref<16x128xf32, #tpu.memory_space<vmem>>, vector<16x128xf32>
    tpu.vector_store %arg10[%c0_23, %c0_24], %26 {strides = array<i32>} : memref<16x128xf32, #tpu.memory_space<vmem>>, vector<16x128xf32>,
    return
  }
  func.func @transform_0(%arg0: i32) -> (i32, i32) {
    %c0_i32 = arith.constant 0 : i32
    %c0_i32_0 = arith.constant 0 : i32
    return %arg0, %c0_i32 : i32, i32
  }
  func.func @transform_1(%arg0: i32) -> (i32, i32) {
    %c0_i32 = arith.constant 0 : i32
    %c0_i32_0 = arith.constant 0 : i32
    %c0_i32_1 = arith.constant 0 : i32
    return %c0_i32, %c0_i32_0 : i32, i32
  }
  func.func @transform_2(%arg0: i32) -> (i32, i32) {
    %c0_i32 = arith.constant 0 : i32
    %c0_i32_0 = arith.constant 0 : i32
    %c0_i32_1 = arith.constant 0 : i32
    return %c0_i32, %c0_i32_0 : i32, i32
  }
  func.func @transform_3(%arg0: i32) -> (i32, i32) {
    %c0_i32 = arith.constant 0 : i32
    %c0_i32_0 = arith.constant 0 : i32
    %c0_i32_1 = arith.constant 0 : i32
    return %c0_i32, %c0_i32_0 : i32, i32
  }
  func.func @transform_4(%arg0: i32) -> (i32, i32) {
    %c0_i32 = arith.constant 0 : i32
    %c0_i32_0 = arith.constant 0 : i32
    %c0_i32_1 = arith.constant 0 : i32
    return %c0_i32, %c0_i32_0 : i32, i32
  }
  func.func @transform_5(%arg0: i32) -> (i32, i32) {
    %c0_i32 = arith.constant 0 : i32
    %c0_i32_0 = arith.constant 0 : i32
    %c0_i32_1 = arith.constant 0 : i32
    return %c0_i32, %c0_i32_0 : i32, i32
  }
  func.func @transform_6(%arg0: i32) -> (i32, i32) {
    %c0_i32 = arith.constant 0 : i32
    %c0_i32_0 = arith.constant 0 : i32
    %c0_i32_1 = arith.constant 0 : i32
    return %c0_i32, %c0_i32_0 : i32, i32
  }
  func.func @transform_7(%arg0: i32) -> (i32, i32) {
    %c0_i32 = arith.constant 0 : i32
    %c0_i32_0 = arith.constant 0 : i32
    %c0_i32_1 = arith.constant 0 : i32
    return %c0_i32, %c0_i32_0 : i32, i32
  }
  func.func @transform_8(%arg0: i32) -> (i32, i32) {
    %c0_i32 = arith.constant 0 : i32
    %c0_i32_0 = arith.constant 0 : i32
    %c0_i32_1 = arith.constant 0 : i32
    return %c0_i32, %c0_i32_0 : i32, i32
  }
  func.func @transform_9(%arg0: i32) -> (i32, i32) {
    %c0_i32 = arith.constant 0 : i32
    %c0_i32_0 = arith.constant 0 : i32
    return %arg0, %c0_i32 : i32, i32
  }
}

</mosaic_0001>

<llo_original>
// kernel: std_regressor_forward.1
$region0: #{std_regressor_forward.1}
  #allocation0 [shape = 'u32[]', space=smem, size = 0x4, offset = 0x4, fixed_abs, tag = 'smem constant byte address 0x4 - core index']
  #allocation1 [shape = 'u32[144,128]{1,0:T(1,128)}', space=vmem, size = 0x12000, scoped, tag = 'internal scratch']
  %s0 = inlined_call_operand.vmem [shape: f32[16,16], index: 0, kind: input, shape index: {}]
  %s1 = inlined_call_operand.vmem [shape: f32[16,128], index: 1, kind: input, shape index: {}]
  %s2 = inlined_call_operand.vmem [shape: f32[1,128], index: 2, kind: input, shape index: {}]
  %s3 = inlined_call_operand.vmem [shape: f32[128,128], index: 3, kind: input, shape index: {}]
  %s4 = inlined_call_operand.vmem [shape: f32[1,128], index: 4, kind: input, shape index: {}]
  %s5 = inlined_call_operand.vmem [shape: f32[128,128], index: 5, kind: input, shape index: {}]
  %s6 = inlined_call_operand.vmem [shape: f32[1,128], index: 6, kind: input, shape index: {}]
  %s7 = inlined_call_operand.vmem [shape: f32[128,128], index: 7, kind: input, shape index: {}]
  %s8 = inlined_call_operand.vmem [shape: f32[1,128], index: 8, kind: input, shape index: {}]
  %s9 = inlined_call_operand.vmem [shape: f32[16,128], index: 9, kind: output, shape index: {}]
  %s10 = sld [smem:[#allocation0]]
  $region46: #{std_regressor_forward.1} parent=0
    _
  %s12 = ssub.s32 1, %s10
  %s13 = scalar_select 0, %s12, %s10
  // Predicated region
  $region2: #{std_regressor_forward.1} parent=0 // pred_check
    _
  $region3: #{std_regressor_forward.1} parent=0 // pred_check_branch
    %15 = sbr.rel (0) target = $region5
  $region4: #{std_regressor_forward.1} parent=0 // pred_region
    _
  $region5: #{std_regressor_forward.1} parent=0 // pred_fallthru
    _
  // Predicated region
  $region6: #{std_regressor_forward.1} parent=0 // pred_check
    _
  $region7: #{std_regressor_forward.1} parent=0 // pred_check_branch
    %17 = sbr.rel (0) target = $region9
  $region8: #{std_regressor_forward.1} parent=0 // pred_region
    _
  $region9: #{std_regressor_forward.1} parent=0 // pred_fallthru
    _
  // Predicated region
  $region10: #{std_regressor_forward.1} parent=0 // pred_check
    _
  $region11: #{std_regressor_forward.1} parent=0 // pred_check_branch
    %19 = sbr.rel (0) target = $region13
  $region12: #{std_regressor_forward.1} parent=0 // pred_region
    _
  $region13: #{std_regressor_forward.1} parent=0 // pred_fallthru
    _
  // Predicated region
  $region14: #{std_regressor_forward.1} parent=0 // pred_check
    _
  $region15: #{std_regressor_forward.1} parent=0 // pred_check_branch
    %21 = sbr.rel (0) target = $region17
  $region16: #{std_regressor_forward.1} parent=0 // pred_region
    _
  $region17: #{std_regressor_forward.1} parent=0 // pred_fallthru
    _
  // Predicated region
  $region18: #{std_regressor_forward.1} parent=0 // pred_check
    _
  $region19: #{std_regressor_forward.1} parent=0 // pred_check_branch
    %23 = sbr.rel (0) target = $region21
  $region20: #{std_regressor_forward.1} parent=0 // pred_region
    _
  $region21: #{std_regressor_forward.1} parent=0 // pred_fallthru
    _
  // Predicated region
  $region22: #{std_regressor_forward.1} parent=0 // pred_check
    _
  $region23: #{std_regressor_forward.1} parent=0 // pred_check_branch
    %25 = sbr.rel (0) target = $region25
  $region24: #{std_regressor_forward.1} parent=0 // pred_region
    _
  $region25: #{std_regressor_forward.1} parent=0 // pred_fallthru
    _
  // Predicated region
  $region26: #{std_regressor_forward.1} parent=0 // pred_check
    _
  $region27: #{std_regressor_forward.1} parent=0 // pred_check_branch
    %27 = sbr.rel (0) target = $region29
  $region28: #{std_regressor_forward.1} parent=0 // pred_region
    _
  $region29: #{std_regressor_forward.1} parent=0 // pred_fallthru
    _
  // Predicated region
  $region30: #{std_regressor_forward.1} parent=0 // pred_check
    _
  $region31: #{std_regressor_forward.1} parent=0 // pred_check_branch
    %29 = sbr.rel (0) target = $region33
  $region32: #{std_regressor_forward.1} parent=0 // pred_region
    _
  $region33: #{std_regressor_forward.1} parent=0 // pred_fallthru
    _
  // Predicated region
  $region34: #{std_regressor_forward.1} parent=0 // pred_check
    _
  $region35: #{std_regressor_forward.1} parent=0 // pred_check_branch
    %31 = sbr.rel (0) target = $region37
  $region36: #{std_regressor_forward.1} parent=0 // pred_region
    _
  $region37: #{std_regressor_forward.1} parent=0 // pred_fallthru
    _
  %v32 = vld [vmem:[%s0] sm:$0xff]
  %v33 = vld [vmem:[%s0 + $0x8] sm:$0xff]
  %v34 = vld [vmem:[%s1] sm:$0xff]
  %v35 = vld [vmem:[%s1 + $0x8] sm:$0xff]
  %v36 = vld [vmem:[%s2] sm:$0x1]
  %v38 = vlaneseq
  %v39 = vshrl.u32 %v38, 7
  %v40 = vsub.s32 0, %v39
  %v41 = vrot.slane %v36, %v40
  %vm43 = vcmask 130048
  %v45 = vsel %vm43, %v32, 0
  %v48 = vsel %vm43, %v33, 0
  %50 = vmatprep.subr.mxu0 0.0
  %51 = vmatpush1.msra.mxu0 %v34
  %52 = vmatprep.subr.mxu0 0.0
  %53 = vmatpush1.msra.mxu0 %v35
  %54 = vmatprep.subr.mxu0 0.0
  %55 = vmatpush1.msra.mxu0 0.0
  %56 = vmatprep.subr.mxu0 0.0
  %57 = vmatpush1.msra.mxu0 0.0
  %58 = vmatprep.subr.mxu0 0.0
  %59 = vmatpush1.msra.mxu0 0.0
  %60 = vmatprep.subr.mxu0 0.0
  %61 = vmatpush1.msra.mxu0 0.0
  %62 = vmatprep.subr.mxu0 0.0
  %63 = vmatpush1.msra.mxu0 0.0
  %64 = vmatprep.subr.mxu0 0.0
  %65 = vmatpush1.msra.mxu0 0.0
  %66 = vmatprep.subr.mxu0 0.0
  %67 = vmatpush1.msra.mxu0 0.0
  %68 = vmatprep.subr.mxu0 0.0
  %69 = vmatpush1.msra.mxu0 0.0
  %70 = vmatprep.subr.mxu0 0.0
  %71 = vmatpush1.msra.mxu0 0.0
  %72 = vmatprep.subr.mxu0 0.0
  %73 = vmatpush1.msra.mxu0 0.0
  %74 = vmatprep.subr.mxu0 0.0
  %75 = vmatpush1.msra.mxu0 0.0
  %76 = vmatprep.subr.mxu0 0.0
  %77 = vmatpush1.msra.mxu0 0.0
  %78 = vmatprep.subr.mxu0 0.0
  %79 = vmatpush1.msra.mxu0 0.0
  %80 = vmatprep.subr.mxu0 0.0
  %81 = vmatpush1.msra.mxu0 0.0
  %82 = vmatprep.subr.mxu0 0.0
  %83 = vmatpush1.msra.mxu0 0.0
  %84 = vmatprep.subr.mxu0 0.0
  %85 = vmatpush1.msra.mxu0 0.0
  %86 = vmatprep.subr.mxu0 0.0
  %87 = vmatpush1.msra.mxu0 0.0
  %88 = vmatprep.subr.mxu0 0.0
  %89 = vmatpush1.msra.mxu0 0.0
  %90 = vmatprep.subr.mxu0 0.0
  %91 = vmatpush1.msra.mxu0 0.0
  %92 = vmatprep.subr.mxu0 0.0
  %93 = vmatpush1.msra.mxu0 0.0
  %94 = vmatprep.subr.mxu0 0.0
  %95 = vmatpush1.msra.mxu0 0.0
  %96 = vmatprep.subr.mxu0 0.0
  %97 = vmatpush1.msra.mxu0 0.0
  %98 = vmatprep.subr.mxu0 0.0
  %99 = vmatpush1.msra.mxu0 0.0
  %100 = vmatprep.subr.mxu0 0.0
  %101 = vmatpush1.msra.mxu0 0.0
  %102 = vmatprep.subr.mxu0 0.0
  %103 = vmatpush1.msra.mxu0 0.0
  %104 = vmatprep.subr.mxu0 0.0
  %105 = vmatpush1.msra.mxu0 0.0
  %106 = vmatprep.subr.mxu0 0.0
  %107 = vmatpush1.msra.mxu0 0.0
  %108 = vmatprep.subr.mxu0 0.0
  %109 = vmatpush1.msra.mxu0 0.0
  %110 = vmatprep.subr.mxu0 0.0
  %111 = vmatpush1.msra.mxu0 0.0
  %112 = vmatprep.subr.mxu0 0.0
  %113 = vmatpush1.msra.mxu0 0.0
  %114 = vmatprep.mubr.f32.mxu0 0.0
  %115 = vmatmul.mubr.f32.gmra.mrb[0].mxu0 %v45
  %v116 = vpop.f32.mrb[0].mxu0
  %v117 = vadd.f32 %v41, %v116
  %v118 = vpop.f32.mrb[0].mxu0
  %119 = vmatprep.mubr.f32.mxu0 0.0
  %120 = vmatmul.mubr.f32.gmra.mrb[0].mxu0 %v48
  %v121 = vpop.f32.mrb[0].mxu0
  %v122 = vadd.f32 %v41, %v121
  %v123 = vpop.f32.mrb[0].mxu0
  %124 = vdwg.mxu0
  %v125 = vmax.f32 %v117, 0.0
  %v126 = vmax.f32 %v122, 0.0
  %v127 = vld [vmem:[%s3] sm:$0xff]
  %v128 = vld [vmem:[%s3 + $0x8] sm:$0xff]
  %v129 = vld [vmem:[%s3 + $0x10] sm:$0xff]
  %v130 = vld [vmem:[%s3 + $0x18] sm:$0xff]
  %v131 = vld [vmem:[%s3 + $0x20] sm:$0xff]
  %v132 = vld [vmem:[%s3 + $0x28] sm:$0xff]
  %v133 = vld [vmem:[%s3 + $0x30] sm:$0xff]
  %v134 = vld [vmem:[%s3 + $0x38] sm:$0xff]
  %v135 = vld [vmem:[%s3 + $0x40] sm:$0xff]
  %v136 = vld [vmem:[%s3 + $0x48] sm:$0xff]
  %v137 = vld [vmem:[%s3 + $0x50] sm:$0xff]
  %v138 = vld [vmem:[%s3 + $0x58] sm:$0xff]
  %v139 = vld [vmem:[%s3 + $0x60] sm:$0xff]
  %v140 = vld [vmem:[%s3 + $0x68] sm:$0xff]
  %v141 = vld [vmem:[%s3 + $0x70] sm:$0xff]
  %v142 = vld [vmem:[%s3 + $0x78] sm:$0xff]
  %v143 = vld [vmem:[%s4] sm:$0x1]
  %v145 = vlaneseq
  %v146 = vshrl.u32 %v145, 7
  %v147 = vsub.s32 0, %v146
  %v148 = vrot.slane %v143, %v147
  %150 = vmatprep.subr.mxu0 0.0
  %151 = vmatpush1.msra.mxu0 %v127
  %152 = vmatprep.subr.mxu0 0.0
  %153 = vmatpush1.msra.mxu0 %v128
  %154 = vmatprep.subr.mxu0 0.0
  %155 = vmatpush1.msra.mxu0 %v129
  %156 = vmatprep.subr.mxu0 0.0
  %157 = vmatpush1.msra.mxu0 %v130
  %158 = vmatprep.subr.mxu0 0.0
  %159 = vmatpush1.msra.mxu0 %v131
  %160 = vmatprep.subr.mxu0 0.0
  %161 = vmatpush1.msra.mxu0 %v132
  %162 = vmatprep.subr.mxu0 0.0
  %163 = vmatpush1.msra.mxu0 %v133
  %164 = vmatprep.subr.mxu0 0.0
  %165 = vmatpush1.msra.mxu0 %v134
  %166 = vmatprep.subr.mxu0 0.0
  %167 = vmatpush1.msra.mxu0 %v135
  %168 = vmatprep.subr.mxu0 0.0
  %169 = vmatpush1.msra.mxu0 %v136
  %170 = vmatprep.subr.mxu0 0.0
  %171 = vmatpush1.msra.mxu0 %v137
  %172 = vmatprep.subr.mxu0 0.0
  %173 = vmatpush1.msra.mxu0 %v138
  %174 = vmatprep.subr.mxu0 0.0
  %175 = vmatpush1.msra.mxu0 %v139
  %176 = vmatprep.subr.mxu0 0.0
  %177 = vmatpush1.msra.mxu0 %v140
  %178 = vmatprep.subr.mxu0 0.0
  %179 = vmatpush1.msra.mxu0 %v141
  %180 = vmatprep.subr.mxu0 0.0
  %181 = vmatpush1.msra.mxu0 %v142
  %182 = vmatprep.subr.mxu0 0.0
  %183 = vmatpush1.msra.mxu0 0.0
  %184 = vmatprep.subr.mxu0 0.0
  %185 = vmatpush1.msra.mxu0 0.0
  %186 = vmatprep.subr.mxu0 0.0
  %187 = vmatpush1.msra.mxu0 0.0
  %188 = vmatprep.subr.mxu0 0.0
  %189 = vmatpush1.msra.mxu0 0.0
  %190 = vmatprep.subr.mxu0 0.0
  %191 = vmatpush1.msra.mxu0 0.0
  %192 = vmatprep.subr.mxu0 0.0
  %193 = vmatpush1.msra.mxu0 0.0
  %194 = vmatprep.subr.mxu0 0.0
  %195 = vmatpush1.msra.mxu0 0.0
  %196 = vmatprep.subr.mxu0 0.0
  %197 = vmatpush1.msra.mxu0 0.0
  %198 = vmatprep.subr.mxu0 0.0
  %199 = vmatpush1.msra.mxu0 0.0
  %200 = vmatprep.subr.mxu0 0.0
  %201 = vmatpush1.msra.mxu0 0.0
  %202 = vmatprep.subr.mxu0 0.0
  %203 = vmatpush1.msra.mxu0 0.0
  %204 = vmatprep.subr.mxu0 0.0
  %205 = vmatpush1.msra.mxu0 0.0
  %206 = vmatprep.subr.mxu0 0.0
  %207 = vmatpush1.msra.mxu0 0.0
  %208 = vmatprep.subr.mxu0 0.0
  %209 = vmatpush1.msra.mxu0 0.0
  %210 = vmatprep.subr.mxu0 0.0
  %211 = vmatpush1.msra.mxu0 0.0
  %212 = vmatprep.subr.mxu0 0.0
  %213 = vmatpush1.msra.mxu0 0.0
  %214 = vmatprep.mubr.f32.mxu0 0.0
  %215 = vmatmul.mubr.f32.gmra.mrb[0].mxu0 %v125
  %v216 = vpop.f32.mrb[0].mxu0
  %v217 = vadd.f32 %v148, %v216
  %v218 = vpop.f32.mrb[0].mxu0
  %219 = vmatprep.mubr.f32.mxu0 0.0
  %220 = vmatmul.mubr.f32.gmra.mrb[0].mxu0 %v126
  %v221 = vpop.f32.mrb[0].mxu0
  %v222 = vadd.f32 %v148, %v221
  %v223 = vpop.f32.mrb[0].mxu0
  %224 = vdwg.mxu0
  %v225 = vmax.f32 %v217, 0.0
  %v226 = vmax.f32 %v222, 0.0
  %v227 = vld [vmem:[%s5] sm:$0xff]
  %v228 = vld [vmem:[%s5 + $0x8] sm:$0xff]
  %v229 = vld [vmem:[%s5 + $0x10] sm:$0xff]
  %v230 = vld [vmem:[%s5 + $0x18] sm:$0xff]
  %v231 = vld [vmem:[%s5 + $0x20] sm:$0xff]
  %v232 = vld [vmem:[%s5 + $0x28] sm:$0xff]
  %v233 = vld [vmem:[%s5 + $0x30] sm:$0xff]
  %v234 = vld [vmem:[%s5 + $0x38] sm:$0xff]
  %v235 = vld [vmem:[%s5 + $0x40] sm:$0xff]
  %v236 = vld [vmem:[%s5 + $0x48] sm:$0xff]
  %v237 = vld [vmem:[%s5 + $0x50] sm:$0xff]
  %v238 = vld [vmem:[%s5 + $0x58] sm:$0xff]
  %v239 = vld [vmem:[%s5 + $0x60] sm:$0xff]
  %v240 = vld [vmem:[%s5 + $0x68] sm:$0xff]
  %v241 = vld [vmem:[%s5 + $0x70] sm:$0xff]
  %v242 = vld [vmem:[%s5 + $0x78] sm:$0xff]
  %v243 = vld [vmem:[%s6] sm:$0x1]
  %v245 = vlaneseq
  %v246 = vshrl.u32 %v245, 7
  %v247 = vsub.s32 0, %v246
  %v248 = vrot.slane %v243, %v247
  %250 = vmatprep.subr.mxu0 0.0
  %251 = vmatpush1.msra.mxu0 %v227
  %252 = vmatprep.subr.mxu0 0.0
  %253 = vmatpush1.msra.mxu0 %v228
  %254 = vmatprep.subr.mxu0 0.0
  %255 = vmatpush1.msra.mxu0 %v229
  %256 = vmatprep.subr.mxu0 0.0
  %257 = vmatpush1.msra.mxu0 %v230
  %258 = vmatprep.subr.mxu0 0.0
  %259 = vmatpush1.msra.mxu0 %v231
  %260 = vmatprep.subr.mxu0 0.0
  %261 = vmatpush1.msra.mxu0 %v232
  %262 = vmatprep.subr.mxu0 0.0
  %263 = vmatpush1.msra.mxu0 %v233
  %264 = vmatprep.subr.mxu0 0.0
  %265 = vmatpush1.msra.mxu0 %v234
  %266 = vmatprep.subr.mxu0 0.0
  %267 = vmatpush1.msra.mxu0 %v235
  %268 = vmatprep.subr.mxu0 0.0
  %269 = vmatpush1.msra.mxu0 %v236
  %270 = vmatprep.subr.mxu0 0.0
  %271 = vmatpush1.msra.mxu0 %v237
  %272 = vmatprep.subr.mxu0 0.0
  %273 = vmatpush1.msra.mxu0 %v238
  %274 = vmatprep.subr.mxu0 0.0
  %275 = vmatpush1.msra.mxu0 %v239
  %276 = vmatprep.subr.mxu0 0.0
  %277 = vmatpush1.msra.mxu0 %v240
  %278 = vmatprep.subr.mxu0 0.0
  %279 = vmatpush1.msra.mxu0 %v241
  %280 = vmatprep.subr.mxu0 0.0
  %281 = vmatpush1.msra.mxu0 %v242
  %282 = vmatprep.subr.mxu0 0.0
  %283 = vmatpush1.msra.mxu0 0.0
  %284 = vmatprep.subr.mxu0 0.0
  %285 = vmatpush1.msra.mxu0 0.0
  %286 = vmatprep.subr.mxu0 0.0
  %287 = vmatpush1.msra.mxu0 0.0
  %288 = vmatprep.subr.mxu0 0.0
  %289 = vmatpush1.msra.mxu0 0.0
  %290 = vmatprep.subr.mxu0 0.0
  %291 = vmatpush1.msra.mxu0 0.0
  %292 = vmatprep.subr.mxu0 0.0
  %293 = vmatpush1.msra.mxu0 0.0
  %294 = vmatprep.subr.mxu0 0.0
  %295 = vmatpush1.msra.mxu0 0.0
  %296 = vmatprep.subr.mxu0 0.0
  %297 = vmatpush1.msra.mxu0 0.0
  %298 = vmatprep.subr.mxu0 0.0
  %299 = vmatpush1.msra.mxu0 0.0
  %300 = vmatprep.subr.mxu0 0.0
  %301 = vmatpush1.msra.mxu0 0.0
  %302 = vmatprep.subr.mxu0 0.0
  %303 = vmatpush1.msra.mxu0 0.0
  %304 = vmatprep.subr.mxu0 0.0
  %305 = vmatpush1.msra.mxu0 0.0
  %306 = vmatprep.subr.mxu0 0.0
  %307 = vmatpush1.msra.mxu0 0.0
  %308 = vmatprep.subr.mxu0 0.0
  %309 = vmatpush1.msra.mxu0 0.0
  %310 = vmatprep.subr.mxu0 0.0
  %311 = vmatpush1.msra.mxu0 0.0
  %312 = vmatprep.subr.mxu0 0.0
  %313 = vmatpush1.msra.mxu0 0.0
  %314 = vmatprep.mubr.f32.mxu0 0.0
  %315 = vmatmul.mubr.f32.gmra.mrb[0].mxu0 %v225
  %v316 = vpop.f32.mrb[0].mxu0
  %v317 = vadd.f32 %v248, %v316
  %v318 = vpop.f32.mrb[0].mxu0
  %319 = vmatprep.mubr.f32.mxu0 0.0
  %320 = vmatmul.mubr.f32.gmra.mrb[0].mxu0 %v226
  %v321 = vpop.f32.mrb[0].mxu0
  %v322 = vadd.f32 %v248, %v321
  %v323 = vpop.f32.mrb[0].mxu0
  %324 = vdwg.mxu0
  %v325 = vmax.f32 %v317, 0.0
  %v326 = vmax.f32 %v322, 0.0
  %v327 = vld [vmem:[%s7] sm:$0xff]
  %v328 = vld [vmem:[%s7 + $0x8] sm:$0xff]
  %v329 = vld [vmem:[%s7 + $0x10] sm:$0xff]
  %v330 = vld [vmem:[%s7 + $0x18] sm:$0xff]
  %v331 = vld [vmem:[%s7 + $0x20] sm:$0xff]
  %v332 = vld [vmem:[%s7 + $0x28] sm:$0xff]
  %v333 = vld [vmem:[%s7 + $0x30] sm:$0xff]
  %v334 = vld [vmem:[%s7 + $0x38] sm:$0xff]
  %v335 = vld [vmem:[%s7 + $0x40] sm:$0xff]
  %v336 = vld [vmem:[%s7 + $0x48] sm:$0xff]
  %v337 = vld [vmem:[%s7 + $0x50] sm:$0xff]
  %v338 = vld [vmem:[%s7 + $0x58] sm:$0xff]
  %v339 = vld [vmem:[%s7 + $0x60] sm:$0xff]
  %v340 = vld [vmem:[%s7 + $0x68] sm:$0xff]
  %v341 = vld [vmem:[%s7 + $0x70] sm:$0xff]
  %v342 = vld [vmem:[%s7 + $0x78] sm:$0xff]
  %v343 = vld [vmem:[%s8] sm:$0x1]
  %v345 = vlaneseq
  %v346 = vshrl.u32 %v345, 7
  %v347 = vsub.s32 0, %v346
  %v348 = vrot.slane %v343, %v347
  %350 = vmatprep.subr.mxu0 0.0
  %351 = vmatpush1.msra.mxu0 %v327
  %352 = vmatprep.subr.mxu0 0.0
  %353 = vmatpush1.msra.mxu0 %v328
  %354 = vmatprep.subr.mxu0 0.0
  %355 = vmatpush1.msra.mxu0 %v329
  %356 = vmatprep.subr.mxu0 0.0
  %357 = vmatpush1.msra.mxu0 %v330
  %358 = vmatprep.subr.mxu0 0.0
  %359 = vmatpush1.msra.mxu0 %v331
  %360 = vmatprep.subr.mxu0 0.0
  %361 = vmatpush1.msra.mxu0 %v332
  %362 = vmatprep.subr.mxu0 0.0
  %363 = vmatpush1.msra.mxu0 %v333
  %364 = vmatprep.subr.mxu0 0.0
  %365 = vmatpush1.msra.mxu0 %v334
  %366 = vmatprep.subr.mxu0 0.0
  %367 = vmatpush1.msra.mxu0 %v335
  %368 = vmatprep.subr.mxu0 0.0
  %369 = vmatpush1.msra.mxu0 %v336
  %370 = vmatprep.subr.mxu0 0.0
  %371 = vmatpush1.msra.mxu0 %v337
  %372 = vmatprep.subr.mxu0 0.0
  %373 = vmatpush1.msra.mxu0 %v338
  %374 = vmatprep.subr.mxu0 0.0
  %375 = vmatpush1.msra.mxu0 %v339
  %376 = vmatprep.subr.mxu0 0.0
  %377 = vmatpush1.msra.mxu0 %v340
  %378 = vmatprep.subr.mxu0 0.0
  %379 = vmatpush1.msra.mxu0 %v341
  %380 = vmatprep.subr.mxu0 0.0
  %381 = vmatpush1.msra.mxu0 %v342
  %382 = vmatprep.subr.mxu0 0.0
  %383 = vmatpush1.msra.mxu0 0.0
  %384 = vmatprep.subr.mxu0 0.0
  %385 = vmatpush1.msra.mxu0 0.0
  %386 = vmatprep.subr.mxu0 0.0
  %387 = vmatpush1.msra.mxu0 0.0
  %388 = vmatprep.subr.mxu0 0.0
  %389 = vmatpush1.msra.mxu0 0.0
  %390 = vmatprep.subr.mxu0 0.0
  %391 = vmatpush1.msra.mxu0 0.0
  %392 = vmatprep.subr.mxu0 0.0
  %393 = vmatpush1.msra.mxu0 0.0
  %394 = vmatprep.subr.mxu0 0.0
  %395 = vmatpush1.msra.mxu0 0.0
  %396 = vmatprep.subr.mxu0 0.0
  %397 = vmatpush1.msra.mxu0 0.0
  %398 = vmatprep.subr.mxu0 0.0
  %399 = vmatpush1.msra.mxu0 0.0
  %400 = vmatprep.subr.mxu0 0.0
  %401 = vmatpush1.msra.mxu0 0.0
  %402 = vmatprep.subr.mxu0 0.0
  %403 = vmatpush1.msra.mxu0 0.0
  %404 = vmatprep.subr.mxu0 0.0
  %405 = vmatpush1.msra.mxu0 0.0
  %406 = vmatprep.subr.mxu0 0.0
  %407 = vmatpush1.msra.mxu0 0.0
  %408 = vmatprep.subr.mxu0 0.0
  %409 = vmatpush1.msra.mxu0 0.0
  %410 = vmatprep.subr.mxu0 0.0
  %411 = vmatpush1.msra.mxu0 0.0
  %412 = vmatprep.subr.mxu0 0.0
  %413 = vmatpush1.msra.mxu0 0.0
  %414 = vmatprep.mubr.f32.mxu0 0.0
  %415 = vmatmul.mubr.f32.gmra.mrb[0].mxu0 %v325
  %v416 = vpop.f32.mrb[0].mxu0
  %v417 = vadd.f32 %v348, %v416
  %v418 = vpop.f32.mrb[0].mxu0
  %419 = vmatprep.mubr.f32.mxu0 0.0
  %420 = vmatmul.mubr.f32.gmra.mrb[0].mxu0 %v326
  %v421 = vpop.f32.mrb[0].mxu0
  %v422 = vadd.f32 %v348, %v421
  %v423 = vpop.f32.mrb[0].mxu0
  %424 = vdwg.mxu0
  %425 = vst [vmem:[%s9] sm:$0xff] %v417
  %426 = vst [vmem:[%s9 + $0x8] sm:$0xff] %v422
  // Predicated region
  $region38: #{std_regressor_forward.1} parent=0 // pred_check
    _
  $region39: #{std_regressor_forward.1} parent=0 // pred_check_branch
    %428 = sbr.rel (0) target = $region41
  $region40: #{std_regressor_forward.1} parent=0 // pred_region
    _
  $region41: #{std_regressor_forward.1} parent=0 // pred_fallthru
    _
  // Predicated region
  $region42: #{std_regressor_forward.1} parent=0 // pred_check
    _
  $region43: #{std_regressor_forward.1} parent=0 // pred_check_branch
    %430 = sbr.rel (0) target = $region45
  $region44: #{std_regressor_forward.1} parent=0 // pred_region
    _
  $region45: #{std_regressor_forward.1} parent=0 // pred_fallthru
    _

</llo_original>
